<compile_context>
chip_gen: v6e
topology: v6e:2x2x1
jax: 0.10.0
libtpu: 0.0.40
codegen_flags: <defaults>
</compile_context>

<pallas_src>
import functools

import jax
import jax.numpy as jnp
from jax.experimental import pallas as pl
from jax.experimental.pallas import tpu as pltpu


def _round_up(x: int, m: int) -> int:
    return ((x + m - 1) // m) * m


def _generation_params():
    """(target_block_elems, num_partials, vmem_limit_bytes) for this TPU gen.

    Conservative (v5e-safe) defaults if the generation cannot be determined.
    """
    kind = ""
    try:
        kind = (jax.devices()[0].device_kind or "").lower()
    except Exception:
        pass
    if "v7" in kind or "tpu7" in kind:
        # 2 TCs/chip, ~3.2 TB/s HBM, 64 MiB VMEM: big blocks + 2-core split.
        return 2 * 1024 * 1024, 2, 48 * 1024 * 1024
    if "v6" in kind:
        # 1 TC, ~1.4 TB/s HBM, 32 MiB default scoped VMEM (128 MiB physical).
        return 1024 * 1024, 1, None
    # v5e / unknown: 16 MiB default scoped VMEM -> ~2 MiB f32 per input block.
    return 512 * 1024, 1, None


def _mse_sum_kernel(x_ref, y_ref, o_ref, acc_ref, *,
                    total_rows, block_rows, blocks_per_core, two_axes):
    if two_axes:
        c = pl.program_id(0)          # core / partial-sum index (CORE_PARALLEL)
        i = pl.program_id(1)          # reduction step ("arbitrary")
        n_steps = pl.num_programs(1)
    else:
        c = 0
        i = pl.program_id(0)
        n_steps = pl.num_programs(0)

    @pl.when(i == 0)
    def _():
        acc_ref[...] = jnp.zeros_like(acc_ref)

    d = x_ref[...].astype(jnp.float32) - y_ref[...].astype(jnp.float32)
    sq = d * d
    lanes = sq.shape[1]
    sq3 = sq.reshape(block_rows // 8, 8, lanes)

    row0 = (c * blocks_per_core + i) * block_rows

    # Fast path (steady state): whole block is in range -> plain VPU
    # accumulate, no iota/compare/select in the hot loop.
    @pl.when(row0 + block_rows <= total_rows)
    def _():
        acc_ref[...] += jnp.sum(sq3, axis=0)

    # Slow path: ragged last block or clamped duplicate block -> mask rows
    # past the real array (bound folded into a scalar: iota < rows_left).
    @pl.when(row0 + block_rows > total_rows)
    def _():
        rows_left = total_rows - row0       # <= 0 for fully clamped duplicates
        row_idx = jax.lax.broadcasted_iota(jnp.int32, sq.shape, 0)
        masked = jnp.where(row_idx < rows_left, sq, 0.0)
        acc_ref[...] += jnp.sum(masked.reshape(block_rows // 8, 8, lanes), axis=0)

    # One cross-lane (XLU) reduction per core, only in the epilogue.
    @pl.when(i == n_steps - 1)
    def _():
        o_ref[0, 0] = jnp.sum(acc_ref[...])


def mse_loss(inputs: jax.Array, targets: jax.Array) -> jax.Array:
    """((inputs - targets) ** 2).mean(), computed with a Pallas TPU kernel."""
    assert inputs.shape == targets.shape
    n_elem = inputs.size
    out_dtype = jnp.promote_types(inputs.dtype, targets.dtype)

    xf = inputs.reshape(-1)
    yf = targets.reshape(-1)

    # TODO(synk): rare ragged path (n % 128 != 0) still pads (full HBM copy);
    # a fully in-kernel lane mask would require manual DMA from a 1-D HBM ref.
    if n_elem % 128 != 0:
        pad = (-n_elem) % 128
        xf = jnp.pad(xf, (0, pad))
        yf = jnp.pad(yf, (0, pad))
    n_padded = xf.shape[0]

    for lanes in (1024, 512, 256, 128):
        if n_padded % lanes == 0:
            break

    target_block_elems, num_partials, vmem_limit = _generation_params()

    rows = n_padded // lanes
    block_rows = min(max(target_block_elems // lanes, 8), _round_up(rows, 8))
    num_blocks = pl.cdiv(rows, block_rows)
    blocks_per_core = pl.cdiv(num_blocks, num_partials)

    x2d = xf.reshape(rows, lanes)
    y2d = yf.reshape(rows, lanes)

    two_axes = num_partials > 1
    if two_axes:
        grid = (num_partials, blocks_per_core)

        def in_index_map(c, i):
            # Clamp so a core with no remaining work re-reads a valid block;
            # its contribution is masked to zero inside the kernel.
            return (jnp.minimum(c * blocks_per_core + i, num_blocks - 1), 0)

        out_index_map = lambda c, i: (c, 0)
        dim_sem = (pltpu.CORE_PARALLEL, pltpu.ARBITRARY)
    else:
        grid = (num_blocks,)

        def in_index_map(i):
            return (i, 0)

        out_index_map = lambda i: (0, 0)
        dim_sem = (pltpu.ARBITRARY,)

    kernel = functools.partial(
        _mse_sum_kernel,
        total_rows=rows,
        block_rows=block_rows,
        blocks_per_core=blocks_per_core,
        two_axes=two_axes,
    )

    bytes_in = n_padded * (x2d.dtype.itemsize + y2d.dtype.itemsize)

    partials = pl.pallas_call(
        kernel,
        out_shape=jax.ShapeDtypeStruct((num_partials, 1), jnp.float32),
        grid_spec=pltpu.PrefetchScalarGridSpec(
            num_scalar_prefetch=0,
            grid=grid,
            in_specs=[
                pl.BlockSpec((block_rows, lanes), in_index_map),
                pl.BlockSpec((block_rows, lanes), in_index_map),
            ],
            out_specs=pl.BlockSpec(
                (1, 1), out_index_map, memory_space=pltpu.MemorySpace.SMEM
            ),
            scratch_shapes=[pltpu.VMEM((8, lanes), jnp.float32)],
        ),
        compiler_params=pltpu.CompilerParams(
            dimension_semantics=dim_sem,
            vmem_limit_bytes=vmem_limit,
        ),
        cost_estimate=pl.CostEstimate(
            flops=3 * n_elem,
            transcendentals=0,
            bytes_accessed=bytes_in + 4 * num_partials,
        ),
    )(x2d, y2d)

    total = jnp.sum(partials)
    return (total / jnp.float32(n_elem)).astype(out_dtype)


if __name__ == "__main__":
    key = jax.random.PRNGKey(0)
    k1, k2, k3, k4 = jax.random.split(key, 4)

    # Small NCHW shapes consistent with a UNet-style loss.
    # Case 1: ragged block (rows < block_rows) -> exercises the masked path.
    x1 = jax.random.normal(k1, (2, 4, 16, 16), dtype=jnp.float32)
    t1 = jax.random.normal(k2, (2, 4, 16, 16), dtype=jnp.float32)
    out1 = mse_loss(x1, t1)
    jax.block_until_ready(out1)
    ref1 = jnp.mean((x1 - t1) ** 2)
    assert jnp.allclose(out1, ref1, rtol=1e-6, atol=1e-6), (out1, ref1)

    # Case 2: exactly one full block -> exercises the unmasked fast path.
    x2 = jax.random.normal(k3, (2, 4, 32, 32), dtype=jnp.float32)
    t2 = jax.random.normal(k4, (2, 4, 32, 32), dtype=jnp.float32)
    out2 = mse_loss(x2, t2)
    jax.block_until_ready(out2)
    ref2 = jnp.mean((x2 - t2) ** 2)
    assert jnp.allclose(out2, ref2, rtol=1e-6, atol=1e-6), (out2, ref2)

    print("KERNEL_OK")
</pallas_src>

<mosaic_0001>
module attributes {stable_mosaic.version = 11 : i64} {
  func.func @_mse_sum_kernel(%arg0: i32, %arg1: memref<8x1024xf32, #tpu.memory_space<vmem>>, %arg2: memref<8x1024xf32, #tpu.memory_space<vmem>>, %arg3: memref<1x1xf32, #tpu.memory_space<smem>>, %arg4: memref<8x1024xf32, #tpu.memory_space<vmem>>) attributes {dimension_semantics = [#tpu.dimension_semantics<arbitrary>], iteration_bounds = array<i64: 1>, scalar_prefetch = 0 : i64, scratch_operands = 1 : i64, tpu.core_type = #tpu.core_type<tc>, window_params = [{transform_indices = @transform_0, window_bounds = array<i64: 8, 1024>}, {transform_indices = @transform_1, window_bounds = array<i64: 8, 1024>}, {transform_indices = @transform_2, window_bounds = array<i64: 1, 1>}]} {
    %c0_i32 = arith.constant 0 : i32
    %0 = arith.cmpi eq, %arg0, %c0_i32 : i32
    %1 = arith.extui %0 : i1 to i32
    %c0_i32_0 = arith.constant 0 : i32
    %2 = arith.cmpi ne, %1, %c0_i32_0 : i32
    scf.if %2 {
      %cst = arith.constant 0.000000e+00 : f32
      %21 = vector.broadcast %cst : f32 to vector<8x1024xf32>
      %c0_12 = arith.constant 0 : index
      %c0_13 = arith.constant 0 : index
      %22 = vector.load %arg4[%c0_12, %c0_13] : memref<8x1024xf32, #tpu.memory_space<vmem>>, vector<8x1024xf32>
      tpu.vector_store %arg4[%c0_12, %c0_13], %21 {strides = array<i32>} : memref<8x1024xf32, #tpu.memory_space<vmem>>, vector<8x1024xf32>,
    } else {
    }
    %c0 = arith.constant 0 : index
    %c0_1 = arith.constant 0 : index
    %3 = vector.load %arg1[%c0, %c0_1] : memref<8x1024xf32, #tpu.memory_space<vmem>>, vector<8x1024xf32>
    %c0_2 = arith.constant 0 : index
    %c0_3 = arith.constant 0 : index
    %4 = vector.load %arg2[%c0_2, %c0_3] : memref<8x1024xf32, #tpu.memory_space<vmem>>, vector<8x1024xf32>
    %5 = arith.subf %3, %4 : vector<8x1024xf32>
    %6 = arith.mulf %5, %5 : vector<8x1024xf32>
    %7 = vector.shape_cast %6 : vector<8x1024xf32> to vector<1x8x1024xf32>
    %c0_i32_4 = arith.constant 0 : i32
    %8 = arith.addi %c0_i32_4, %arg0 : i32
    %c8_i32 = arith.constant 8 : i32
    %9 = arith.muli %8, %c8_i32 : i32
    %c8_i32_5 = arith.constant 8 : i32
    %10 = arith.addi %9, %c8_i32_5 : i32
    %c2_i32 = arith.constant 2 : i32
    %11 = arith.cmpi sle, %10, %c2_i32 : i32
    %12 = arith.extui %11 : i1 to i32
    %c0_i32_6 = arith.constant 0 : i32
    %13 = arith.cmpi ne, %12, %c0_i32_6 : i32
    scf.if %13 {
      %c0_12 = arith.constant 0 : index
      %c0_13 = arith.constant 0 : index
      %21 = vector.load %arg4[%c0_12, %c0_13] : memref<8x1024xf32, #tpu.memory_space<vmem>>, vector<8x1024xf32>
      %cst = arith.constant dense<0.000000e+00> : vector<8x1024xf32>
      %22 = vector.multi_reduction <add>, %7, %cst [0] : vector<1x8x1024xf32> to vector<8x1024xf32>
      %23 = arith.addf %21, %22 : vector<8x1024xf32>
      %c0_14 = arith.constant 0 : index
      %c0_15 = arith.constant 0 : index
      %24 = vector.load %arg4[%c0_14, %c0_15] : memref<8x1024xf32, #tpu.memory_space<vmem>>, vector<8x1024xf32>
      tpu.vector_store %arg4[%c0_14, %c0_15], %23 {strides = array<i32>} : memref<8x1024xf32, #tpu.memory_space<vmem>>, vector<8x1024xf32>,
    } else {
    }
    %c8_i32_7 = arith.constant 8 : i32
    %14 = arith.addi %9, %c8_i32_7 : i32
    %c2_i32_8 = arith.constant 2 : i32
    %15 = arith.cmpi sgt, %14, %c2_i32_8 : i32
    %16 = arith.extui %15 : i1 to i32
    %c0_i32_9 = arith.constant 0 : i32
    %17 = arith.cmpi ne, %16, %c0_i32_9 : i32
    scf.if %17 {
      %c2_i32_12 = arith.constant 2 : i32
      %21 = arith.subi %c2_i32_12, %9 : i32
      %22 = tpu.iota {dimensions = array<i32: 0>} : vector<8x1024xi32>
      %23 = vector.broadcast %21 : i32 to vector<8x1024xi32>
      %24 = arith.cmpi slt, %22, %23 : vector<8x1024xi32>
      %cst = arith.constant 0.000000e+00 : f32
      %25 = vector.broadcast %cst : f32 to vector<8x1024xf32>
      %26 = arith.select %24, %6, %25 : vector<8x1024xi1>, vector<8x1024xf32>
      %c0_13 = arith.constant 0 : index
      %c0_14 = arith.constant 0 : index
      %27 = vector.load %arg4[%c0_13, %c0_14] : memref<8x1024xf32, #tpu.memory_space<vmem>>, vector<8x1024xf32>
      %28 = vector.shape_cast %26 : vector<8x1024xf32> to vector<1x8x1024xf32>
      %cst_15 = arith.constant dense<0.000000e+00> : vector<8x1024xf32>
      %29 = vector.multi_reduction <add>, %28, %cst_15 [0] : vector<1x8x1024xf32> to vector<8x1024xf32>
      %30 = arith.addf %27, %29 : vector<8x1024xf32>
      %c0_16 = arith.constant 0 : index
      %c0_17 = arith.constant 0 : index
      %31 = vector.load %arg4[%c0_16, %c0_17] : memref<8x1024xf32, #tpu.memory_space<vmem>>, vector<8x1024xf32>
      tpu.vector_store %arg4[%c0_16, %c0_17], %30 {strides = array<i32>} : memref<8x1024xf32, #tpu.memory_space<vmem>>, vector<8x1024xf32>,
    } else {
    }
    %c0_i32_10 = arith.constant 0 : i32
    %18 = arith.cmpi eq, %arg0, %c0_i32_10 : i32
    %19 = arith.extui %18 : i1 to i32
    %c0_i32_11 = arith.constant 0 : i32
    %20 = arith.cmpi ne, %19, %c0_i32_11 : i32
    scf.if %20 {
      %c0_12 = arith.constant 0 : index
      %c0_13 = arith.constant 0 : index
      %21 = vector.load %arg4[%c0_12, %c0_13] : memref<8x1024xf32, #tpu.memory_space<vmem>>, vector<8x1024xf32>
      %22 = vector.shape_cast %21 : vector<8x1024xf32> to vector<1x8x1024xf32>
      %cst = arith.constant dense<0.000000e+00> : vector<1xf32>
      %23 = vector.multi_reduction <add>, %22, %cst [1, 2] : vector<1x8x1024xf32> to vector<1xf32>
      %24 = vector.shape_cast %23 : vector<1xf32> to vector<1x1x1xf32>
      %25 = vector.extract %24[0, 0, 0] : f32 from vector<1x1x1xf32>
      %c0_14 = arith.constant 0 : index
      %c0_15 = arith.constant 0 : index
      %26 = memref.load %arg3[%c0_14, %c0_15] : memref<1x1xf32, #tpu.memory_space<smem>>
      memref.store %25, %arg3[%c0_14, %c0_15] : memref<1x1xf32, #tpu.memory_space<smem>>
    } else {
    }
    return
  }
  func.func @transform_0(%arg0: i32) -> (i32, i32) {
    %c0_i32 = arith.constant 0 : i32
    %c0_i32_0 = arith.constant 0 : i32
    return %arg0, %c0_i32 : i32, i32
  }
  func.func @transform_1(%arg0: i32) -> (i32, i32) {
    %c0_i32 = arith.constant 0 : i32
    %c0_i32_0 = arith.constant 0 : i32
    return %arg0, %c0_i32 : i32, i32
  }
  func.func @transform_2(%arg0: i32) -> (i32, i32) {
    %c0_i32 = arith.constant 0 : i32
    %c0_i32_0 = arith.constant 0 : i32
    %c0_i32_1 = arith.constant 0 : i32
    return %c0_i32, %c0_i32_0 : i32, i32
  }
}

</mosaic_0001>

<llo_original>
// kernel: tpu_custom_call.1
$region0: #{tpu_custom_call.1}
  #allocation0 [shape = 'u32[]', space=smem, size = 0x4, offset = 0x4, fixed_abs, tag = 'smem constant byte address 0x4 - core index']
  #allocation1 [shape = 'u32[144,128]{1,0:T(1,128)}', space=vmem, size = 0x12000, scoped, tag = 'internal scratch']
  #allocation2 [shape = 'f32[8,1024]{1,0:T(8,128)}', space=vmem, size = 0x8000, scoped, tag = 'scratch operand']
  %s0 = inlined_call_operand.hbm [shape: f32[2,1024], index: 0, kind: input, shape index: {}]
  %s1 = inlined_call_operand.hbm [shape: f32[2,1024], index: 1, kind: input, shape index: {}]
  %s2 = inlined_call_operand.hbm [shape: f32[1,1], index: 2, kind: output, shape index: {}]
  %s3 = sld [smem:[#allocation0]]
  $region42: #{tpu_custom_call.1} parent=0
    _
  %s5 = ssub.s32 1, %s3
  %s6 = scalar_select 0, %s5, %s3
  $region1: #{tpu_custom_call.1} parent=0
    #allocation3 [shape = 'u8[32768]{0}', space=vmem, size = 0x8000, scoped, tag = 'input window, operand 0, single buffered']
    #allocation4 [shape = 's32[1]{0}', space=sflag, size = 0x4, scoped, tag = 'scoped memory for tpu_custom_call.1']
    #allocation5 [shape = 's32[1]{0}', space=sflag, size = 0x4, scoped, tag = 'scoped memory for tpu_custom_call.1']
    #allocation6 [shape = 'u8[32768]{0}', space=vmem, size = 0x8000, scoped, tag = 'input window, operand 1, single buffered']
    #allocation7 [shape = 's32[1]{0}', space=sflag, size = 0x4, scoped, tag = 'scoped memory for tpu_custom_call.1']
    #allocation8 [shape = 'u8[512]{0}', space=smem, size = 0x200, scoped, tag = 'output window, operand 0, single buffered']
    %7 = vsyncpa [#allocation4], 0
    %8 = vsyncpa [#allocation7], 0
    %9 = vsyncpa [#allocation5], 0
    // Predicated region
    $region2: #{tpu_custom_call.1} parent=1 // pred_check
      _
    $region3: #{tpu_custom_call.1} parent=1 // pred_check_branch
      %11 = sbr.rel (0) target = $region5
    $region4: #{tpu_custom_call.1} parent=1 // pred_region
      %s13 = ssub.s32 1024, 256
      %14 = vsyncadd [#allocation4], %s13
      %s15 = sshll.u32 [#allocation3], 4
      %s16 = int_to_ptr.vmem [resolvable:$true] %s15
      %21 = dma.hbm_to_vmem [thread:$0]  %s0, 256, %s16, [#allocation4], 256, 256, 16
    $region5: #{tpu_custom_call.1} parent=1 // pred_fallthru
      _
    // Predicated region
    $region6: #{tpu_custom_call.1} parent=1 // pred_check
      _
    $region7: #{tpu_custom_call.1} parent=1 // pred_check_branch
      %23 = sbr.rel (0) target = $region9
    $region8: #{tpu_custom_call.1} parent=1 // pred_region
      %s25 = ssub.s32 1024, 256
      %26 = vsyncadd [#allocation7], %s25
      %s27 = sshll.u32 [#allocation6], 4
      %s28 = int_to_ptr.vmem [resolvable:$true] %s27
      %33 = dma.hbm_to_vmem [thread:$0]  %s1, 256, %s28, [#allocation7], 256, 256, 16
    $region9: #{tpu_custom_call.1} parent=1 // pred_fallthru
      _
    // Predicated region
    $region10: #{tpu_custom_call.1} parent=1 // pred_check
      _
    $region11: #{tpu_custom_call.1} parent=1 // pred_check_branch
      %35 = sbr.rel (0) target = $region13
    $region12: #{tpu_custom_call.1} parent=1 // pred_region
      %36 = dma.done [#allocation4], 1024
    $region13: #{tpu_custom_call.1} parent=1 // pred_fallthru
      _
    // Predicated region
    $region14: #{tpu_custom_call.1} parent=1 // pred_check
      _
    $region15: #{tpu_custom_call.1} parent=1 // pred_check_branch
      %38 = sbr.rel (0) target = $region17
    $region16: #{tpu_custom_call.1} parent=1 // pred_region
      %39 = dma.done [#allocation7], 1024
    $region17: #{tpu_custom_call.1} parent=1 // pred_fallthru
      _
    %p40 = scmp.eq.s32.totalorder 0, 0
    // Predicated region
    $region18: #{tpu_custom_call.1} parent=1 // pred_check
      %p41 = pneg %p40
    $region19: #{tpu_custom_call.1} parent=1 // pred_check_branch
      %43 = sbr.rel (%p41) target = $region21
    $region20: #{tpu_custom_call.1} parent=1 // pred_region
      %44 = vst [vmem:[#allocation2] sm:$0xff] 0.0
      %45 = vst [vmem:[#allocation2 + $0x8] sm:$0xff] 0.0
      %46 = vst [vmem:[#allocation2 + $0x10] sm:$0xff] 0.0
      %47 = vst [vmem:[#allocation2 + $0x18] sm:$0xff] 0.0
      %48 = vst [vmem:[#allocation2 + $0x20] sm:$0xff] 0.0
      %49 = vst [vmem:[#allocation2 + $0x28] sm:$0xff] 0.0
      %50 = vst [vmem:[#allocation2 + $0x30] sm:$0xff] 0.0
      %51 = vst [vmem:[#allocation2 + $0x38] sm:$0xff] 0.0
    $region21: #{tpu_custom_call.1} parent=1 // pred_fallthru
      _
    %v52 = vld [vmem:[#allocation3] sm:$0xff]
    %v53 = vld [vmem:[#allocation3 + $0x8] sm:$0xff]
    %v54 = vld [vmem:[#allocation3 + $0x10] sm:$0xff]
    %v55 = vld [vmem:[#allocation3 + $0x18] sm:$0xff]
    %v56 = vld [vmem:[#allocation3 + $0x20] sm:$0xff]
    %v57 = vld [vmem:[#allocation3 + $0x28] sm:$0xff]
    %v58 = vld [vmem:[#allocation3 + $0x30] sm:$0xff]
    %v59 = vld [vmem:[#allocation3 + $0x38] sm:$0xff]
    %v60 = vld [vmem:[#allocation6] sm:$0xff]
    %v61 = vld [vmem:[#allocation6 + $0x8] sm:$0xff]
    %v62 = vld [vmem:[#allocation6 + $0x10] sm:$0xff]
    %v63 = vld [vmem:[#allocation6 + $0x18] sm:$0xff]
    %v64 = vld [vmem:[#allocation6 + $0x20] sm:$0xff]
    %v65 = vld [vmem:[#allocation6 + $0x28] sm:$0xff]
    %v66 = vld [vmem:[#allocation6 + $0x30] sm:$0xff]
    %v67 = vld [vmem:[#allocation6 + $0x38] sm:$0xff]
    %v68 = vsub.f32 %v52, %v60
    %v69 = vsub.f32 %v53, %v61
    %v70 = vsub.f32 %v54, %v62
    %v71 = vsub.f32 %v55, %v63
    %v72 = vsub.f32 %v56, %v64
    %v73 = vsub.f32 %v57, %v65
    %v74 = vsub.f32 %v58, %v66
    %v75 = vsub.f32 %v59, %v67
    %v76 = vmul.f32 %v68, %v68
    %v77 = vmul.f32 %v69, %v69
    %v78 = vmul.f32 %v70, %v70
    %v79 = vmul.f32 %v71, %v71
    %v80 = vmul.f32 %v72, %v72
    %v81 = vmul.f32 %v73, %v73
    %v82 = vmul.f32 %v74, %v74
    %v83 = vmul.f32 %v75, %v75
    %s84 = smul.u32 0, 8
    %s85 = sadd.s32 %s84, 8
    %p86 = scmp.le.s32.totalorder %s85, 2
    // Predicated region
    $region22: #{tpu_custom_call.1} parent=1 // pred_check
      %p87 = pneg %p86
    $region23: #{tpu_custom_call.1} parent=1 // pred_check_branch
      %89 = sbr.rel (%p87) target = $region25
    $region24: #{tpu_custom_call.1} parent=1 // pred_region
      %v90 = vld [vmem:[#allocation2] sm:$0xff]
      %v91 = vld [vmem:[#allocation2 + $0x8] sm:$0xff]
      %v92 = vld [vmem:[#allocation2 + $0x10] sm:$0xff]
      %v93 = vld [vmem:[#allocation2 + $0x18] sm:$0xff]
      %v94 = vld [vmem:[#allocation2 + $0x20] sm:$0xff]
      %v95 = vld [vmem:[#allocation2 + $0x28] sm:$0xff]
      %v96 = vld [vmem:[#allocation2 + $0x30] sm:$0xff]
      %v97 = vld [vmem:[#allocation2 + $0x38] sm:$0xff]
      %v98 = vadd.f32 %v76, 0.0
      %v99 = vadd.f32 %v77, 0.0
      %v100 = vadd.f32 %v78, 0.0
      %v101 = vadd.f32 %v79, 0.0
      %v102 = vadd.f32 %v80, 0.0
      %v103 = vadd.f32 %v81, 0.0
      %v104 = vadd.f32 %v82, 0.0
      %v105 = vadd.f32 %v83, 0.0
      %v114 = vcombine.low %v98, %v100
      %v115 = vcombine.high %v98, %v100
      %v116 = vcombine.low %v102, %v104
      %v117 = vcombine.high %v102, %v104
      %v119 = vunpack.c.l.s4 1983009808
      %v120 = vunpack.c.0.s8 %v119
      %v121 = vlaneseq
      %v122 = vshrl.u32 %v121, 7
      %v123 = vsub.s32 %v120, %v122
      %v124 = vrot.slane %v114, %v123
      %v126 = vunpack.c.l.s4 1983009808
      %v127 = vunpack.c.0.s8 %v126
      %v128 = vlaneseq
      %v129 = vshrl.u32 %v128, 7
      %v130 = vsub.s32 %v127, %v129
      %v131 = vrot.slane %v115, %v130
      %v133 = vunpack.c.l.s4 1983009808
      %v134 = vunpack.c.0.s8 %v133
      %v135 = vlaneseq
      %v136 = vshrl.u32 %v135, 7
      %v137 = vsub.s32 %v134, %v136
      %v138 = vrot.slane %v116, %v137
      %v140 = vunpack.c.l.s4 1983009808
      %v141 = vunpack.c.0.s8 %v140
      %v142 = vlaneseq
      %v143 = vshrl.u32 %v142, 7
      %v144 = vsub.s32 %v141, %v143
      %v145 = vrot.slane %v117, %v144
      %v146 = vcombine.low %v124, %v138
      %v147 = vcombine.high %v124, %v138
      %v148 = vcombine.low %v131, %v145
      %v149 = vcombine.high %v131, %v145
      %v150 = vcombine.low %v99, %v101
      %v151 = vcombine.high %v99, %v101
      %v152 = vcombine.low %v103, %v105
      %v153 = vcombine.high %v103, %v105
      %v155 = vunpack.c.l.s4 1983009808
      %v156 = vunpack.c.0.s8 %v155
      %v157 = vlaneseq
      %v158 = vshrl.u32 %v157, 7
      %v159 = vsub.s32 %v156, %v158
      %v160 = vrot.slane %v150, %v159
      %v162 = vunpack.c.l.s4 1983009808
      %v163 = vunpack.c.0.s8 %v162
      %v164 = vlaneseq
      %v165 = vshrl.u32 %v164, 7
      %v166 = vsub.s32 %v163, %v165
      %v167 = vrot.slane %v151, %v166
      %v169 = vunpack.c.l.s4 1983009808
      %v170 = vunpack.c.0.s8 %v169
      %v171 = vlaneseq
      %v172 = vshrl.u32 %v171, 7
      %v173 = vsub.s32 %v170, %v172
      %v174 = vrot.slane %v152, %v173
      %v176 = vunpack.c.l.s4 1983009808
      %v177 = vunpack.c.0.s8 %v176
      %v178 = vlaneseq
      %v179 = vshrl.u32 %v178, 7
      %v180 = vsub.s32 %v177, %v179
      %v181 = vrot.slane %v153, %v180
      %v182 = vcombine.low %v160, %v174
      %v183 = vcombine.high %v160, %v174
      %v184 = vcombine.low %v167, %v181
      %v185 = vcombine.high %v167, %v181
      %v194 = vadd.f32 %v90, %v146
      %v195 = vadd.f32 %v91, %v147
      %v196 = vadd.f32 %v92, %v148
      %v197 = vadd.f32 %v93, %v149
      %v198 = vadd.f32 %v94, %v182
      %v199 = vadd.f32 %v95, %v183
      %v200 = vadd.f32 %v96, %v184
      %v201 = vadd.f32 %v97, %v185
      %202 = vst [vmem:[#allocation2] sm:$0xff] %v194
      %203 = vst [vmem:[#allocation2 + $0x8] sm:$0xff] %v195
      %204 = vst [vmem:[#allocation2 + $0x10] sm:$0xff] %v196
      %205 = vst [vmem:[#allocation2 + $0x18] sm:$0xff] %v197
      %206 = vst [vmem:[#allocation2 + $0x20] sm:$0xff] %v198
      %207 = vst [vmem:[#allocation2 + $0x28] sm:$0xff] %v199
      %208 = vst [vmem:[#allocation2 + $0x30] sm:$0xff] %v200
      %209 = vst [vmem:[#allocation2 + $0x38] sm:$0xff] %v201
    $region25: #{tpu_custom_call.1} parent=1 // pred_fallthru
      _
    %p210 = scmp.gt.s32.totalorder %s85, 2
    // Predicated region
    $region26: #{tpu_custom_call.1} parent=1 // pred_check
      %p211 = pneg %p210
    $region27: #{tpu_custom_call.1} parent=1 // pred_check_branch
      %213 = sbr.rel (%p211) target = $region29
    $region28: #{tpu_custom_call.1} parent=1 // pred_region
      %s214 = ssub.s32 2, %s84
      %v215 = vlaneseq
      %v216 = vshrl.u32 %v215, 7
      %v217 = vstv %s214
      %vm218 = vcmp.lt.s32.totalorder %v216, %v217
      %v227 = vcombine.low %v76, %v78
      %v228 = vcombine.high %v76, %v78
      %v229 = vcombine.low %v80, %v82
      %v230 = vcombine.high %v80, %v82
      %v232 = vunpack.c.l.s4 1983009808
      %v233 = vunpack.c.0.s8 %v232
      %v234 = vlaneseq
      %v235 = vshrl.u32 %v234, 7
      %v236 = vsub.s32 %v233, %v235
      %v237 = vrot.slane %v227, %v236
      %v239 = vunpack.c.l.s4 1983009808
      %v240 = vunpack.c.0.s8 %v239
      %v241 = vlaneseq
      %v242 = vshrl.u32 %v241, 7
      %v243 = vsub.s32 %v240, %v242
      %v244 = vrot.slane %v228, %v243
      %v246 = vunpack.c.l.s4 1983009808
      %v247 = vunpack.c.0.s8 %v246
      %v248 = vlaneseq
      %v249 = vshrl.u32 %v248, 7
      %v250 = vsub.s32 %v247, %v249
      %v251 = vrot.slane %v229, %v250
      %v253 = vunpack.c.l.s4 1983009808
      %v254 = vunpack.c.0.s8 %v253
      %v255 = vlaneseq
      %v256 = vshrl.u32 %v255, 7
      %v257 = vsub.s32 %v254, %v256
      %v258 = vrot.slane %v230, %v257
      %v259 = vcombine.low %v237, %v251
      %v260 = vcombine.high %v237, %v251
      %v261 = vcombine.low %v244, %v258
      %v262 = vcombine.high %v244, %v258
      %v263 = vcombine.low %v77, %v79
      %v264 = vcombine.high %v77, %v79
      %v265 = vcombine.low %v81, %v83
      %v266 = vcombine.high %v81, %v83
      %v268 = vunpack.c.l.s4 1983009808
      %v269 = vunpack.c.0.s8 %v268
      %v270 = vlaneseq
      %v271 = vshrl.u32 %v270, 7
      %v272 = vsub.s32 %v269, %v271
      %v273 = vrot.slane %v263, %v272
      %v275 = vunpack.c.l.s4 1983009808
      %v276 = vunpack.c.0.s8 %v275
      %v277 = vlaneseq
      %v278 = vshrl.u32 %v277, 7
      %v279 = vsub.s32 %v276, %v278
      %v280 = vrot.slane %v264, %v279
      %v282 = vunpack.c.l.s4 1983009808
      %v283 = vunpack.c.0.s8 %v282
      %v284 = vlaneseq
      %v285 = vshrl.u32 %v284, 7
      %v286 = vsub.s32 %v283, %v285
      %v287 = vrot.slane %v265, %v286
      %v289 = vunpack.c.l.s4 1983009808
      %v290 = vunpack.c.0.s8 %v289
      %v291 = vlaneseq
      %v292 = vshrl.u32 %v291, 7
      %v293 = vsub.s32 %v290, %v292
      %v294 = vrot.slane %v266, %v293
      %v295 = vcombine.low %v273, %v287
      %v296 = vcombine.high %v273, %v287
      %v297 = vcombine.low %v280, %v294
      %v298 = vcombine.high %v280, %v294
      %v307 = vsel %vm218, %v259, 0.0
      %v308 = vsel %vm218, %v260, 0.0
      %v309 = vsel %vm218, %v261, 0.0
      %v310 = vsel %vm218, %v262, 0.0
      %v311 = vsel %vm218, %v295, 0.0
      %v312 = vsel %vm218, %v296, 0.0
      %v313 = vsel %vm218, %v297, 0.0
      %v314 = vsel %vm218, %v298, 0.0
      %v315 = vld [vmem:[#allocation2] sm:$0xff]
      %v316 = vld [vmem:[#allocation2 + $0x8] sm:$0xff]
      %v317 = vld [vmem:[#allocation2 + $0x10] sm:$0xff]
      %v318 = vld [vmem:[#allocation2 + $0x18] sm:$0xff]
      %v319 = vld [vmem:[#allocation2 + $0x20] sm:$0xff]
      %v320 = vld [vmem:[#allocation2 + $0x28] sm:$0xff]
      %v321 = vld [vmem:[#allocation2 + $0x30] sm:$0xff]
      %v322 = vld [vmem:[#allocation2 + $0x38] sm:$0xff]
      %v323 = vadd.f32 %v307, 0.0
      %v324 = vadd.f32 %v308, 0.0
      %v325 = vadd.f32 %v309, 0.0
      %v326 = vadd.f32 %v310, 0.0
      %v327 = vadd.f32 %v311, 0.0
      %v328 = vadd.f32 %v312, 0.0
      %v329 = vadd.f32 %v313, 0.0
      %v330 = vadd.f32 %v314, 0.0
      %v331 = vadd.f32 %v315, %v323
      %v332 = vadd.f32 %v316, %v324
      %v333 = vadd.f32 %v317, %v325
      %v334 = vadd.f32 %v318, %v326
      %v335 = vadd.f32 %v319, %v327
      %v336 = vadd.f32 %v320, %v328
      %v337 = vadd.f32 %v321, %v329
      %v338 = vadd.f32 %v322, %v330
      %339 = vst [vmem:[#allocation2] sm:$0xff] %v331
      %340 = vst [vmem:[#allocation2 + $0x8] sm:$0xff] %v332
      %341 = vst [vmem:[#allocation2 + $0x10] sm:$0xff] %v333
      %342 = vst [vmem:[#allocation2 + $0x18] sm:$0xff] %v334
      %343 = vst [vmem:[#allocation2 + $0x20] sm:$0xff] %v335
      %344 = vst [vmem:[#allocation2 + $0x28] sm:$0xff] %v336
      %345 = vst [vmem:[#allocation2 + $0x30] sm:$0xff] %v337
      %346 = vst [vmem:[#allocation2 + $0x38] sm:$0xff] %v338
    $region29: #{tpu_custom_call.1} parent=1 // pred_fallthru
      _
    // Predicated region
    $region30: #{tpu_custom_call.1} parent=1 // pred_check
      %p347 = pneg %p40
    $region31: #{tpu_custom_call.1} parent=1 // pred_check_branch
      %349 = sbr.rel (%p347) target = $region33
    $region32: #{tpu_custom_call.1} parent=1 // pred_region
      %v350 = vld [vmem:[#allocation2] sm:$0xff]
      %v351 = vld [vmem:[#allocation2 + $0x8] sm:$0xff]
      %v352 = vld [vmem:[#allocation2 + $0x10] sm:$0xff]
      %v353 = vld [vmem:[#allocation2 + $0x18] sm:$0xff]
      %v354 = vld [vmem:[#allocation2 + $0x20] sm:$0xff]
      %v355 = vld [vmem:[#allocation2 + $0x28] sm:$0xff]
      %v356 = vld [vmem:[#allocation2 + $0x30] sm:$0xff]
      %v357 = vld [vmem:[#allocation2 + $0x38] sm:$0xff]
      %v358 = vadd.f32 %v350, %v351
      %v359 = vadd.f32 %v358, %v352
      %v360 = vadd.f32 %v359, %v353
      %v361 = vadd.f32 %v360, %v354
      %v362 = vadd.f32 %v361, %v355
      %v363 = vadd.f32 %v362, %v356
      %v364 = vadd.f32 %v363, %v357
      %365 = vadd.xlane.f32.xlu0 %v364
      %v366 = vpop.xlane.xlu0 %365
      %v367 = vrot.slane %v366, 4
      %v368 = vadd.f32 %v366, %v367
      %v369 = vrot.slane %v368, 2
      %v370 = vadd.f32 %v368, %v369
      %v371 = vrot.slane %v370, 1
      %v372 = vadd.f32 %v370, %v371
      %s373 = vtos %v372
      %s374 = scalar_lea.smem [#allocation8], 0
      %375 = sst [smem:[%s374]] %s373
    $region33: #{tpu_custom_call.1} parent=1 // pred_fallthru
      _
    // Predicated region
    $region34: #{tpu_custom_call.1} parent=1 // pred_check
      _
    $region35: #{tpu_custom_call.1} parent=1 // pred_check_branch
      %377 = sbr.rel (0) target = $region37
    $region36: #{tpu_custom_call.1} parent=1 // pred_region
      %s379 = ssub.s32 16, 16
      %380 = vsyncadd [#allocation5], %s379
      %383 = dma.smem_to_hbm [#allocation8], 16, %s2, [#allocation5]
    $region37: #{tpu_custom_call.1} parent=1 // pred_fallthru
      _
    // Predicated region
    $region38: #{tpu_custom_call.1} parent=1 // pred_check
      _
    $region39: #{tpu_custom_call.1} parent=1 // pred_check_branch
      %385 = sbr.rel (0) target = $region41
    $region40: #{tpu_custom_call.1} parent=1 // pred_region
      %386 = dma.done [#allocation5], 16
    $region41: #{tpu_custom_call.1} parent=1 // pred_fallthru
      _
    %387 = sfence
    %388 = vsyncpa [#allocation4], 1
    %389 = vsyncpa [#allocation7], 1
    %390 = vsyncpa [#allocation5], 1

</llo_original>
